<compile_context>
chip_gen: v7x
topology: tpu7x:2x2x1
jax: 0.10.0
libtpu: 0.0.40
codegen_flags: <defaults>
</compile_context>

<pallas_src>
import functools

import jax
import jax.numpy as jnp
import numpy as np
from jax.experimental import pallas as pl
from jax.experimental.pallas import tpu as pltpu

# Below this kernel size the plain tap chain issues fewer VMEM passes than doubling.
_DOUBLING_MIN_K = 11


def _decomp_kernel(x_ref, seasonal_ref, trend_ref, xp_ref, *, kernel_size, pad):
    # x_ref:        (TB, L, TC)            input block
    # seasonal_ref: (TB, L, TC)
    # trend_ref:    (TB, L, TC)
    # xp_ref:       (TB, L + 2*pad, TC)    f32 VMEM scratch (zero-padded staging buffer)
    tb, l, tc = x_ref.shape
    xf = x_ref[...].astype(jnp.float32)

    # Stage the zero-padded signal (count_include_pad=True -> pad rows really are zeros and
    # the divisor is always k).  The pad bands are only 2*pad rows, so re-zeroing them per
    # grid step is noise next to the L-row staging store.
    if pad > 0:
        zeros = jnp.zeros((tb, pad, tc), dtype=jnp.float32)
        xp_ref[:, 0:pad, :] = zeros
        xp_ref[:, pad + l:pad + l + pad, :] = zeros
    xp_ref[:, pad:pad + l, :] = xf

    if kernel_size < _DOUBLING_MIN_K:
        # Small k: straight k-tap shifted sum (k-1 VPU adds, k sublane-shifted loads).
        acc = xp_ref[:, 0:l, :]
        for d in range(1, kernel_size):
            acc = acc + xp_ref[:, d:d + l, :]
    else:
        # Large k: log-depth window sum.  Build width-2^t partial sums in place
        # (Hillis-Steele doubling) and combine the binary decomposition of k, so the VMEM
        # load chain is O(log2 k) passes instead of k -- keeps the kernel off the vld-slot
        # ceiling on v6e/v7x.  All accumulation stays in f32.
        # NOTE: shift offsets (1, 2, 4, ...) are mostly sublane-misaligned; Mosaic handles
        # the relayout, and there are only ~log2(k) of them instead of k-1.
        n = l + 2 * pad
        acc = None
        off, w, valid, rem = 0, 1, n, kernel_size
        while rem:
            if rem & 1:
                term = xp_ref[:, off:off + l, :]     # width-w partial sums at offset `off`
                acc = term if acc is None else acc + term
                off += w
            rem >>= 1
            if rem:
                nv = valid - w
                # Double the partial-sum width in place: reads materialize before the store.
                xp_ref[:, 0:nv, :] = xp_ref[:, 0:nv, :] + xp_ref[:, w:w + nv, :]
                valid, w = nv, 2 * w

    trend = acc * jnp.float32(1.0 / kernel_size)
    trend_ref[...] = trend.astype(trend_ref.dtype)
    seasonal_ref[...] = (xf - trend).astype(seasonal_ref.dtype)


def _vmem_limit_bytes():
    """Per-chip VMEM budget: half of physical capacity, capped at 64 MiB."""
    cap = None
    try:
        info = pltpu.get_tpu_info()
        cap = getattr(info, "vmem_capacity_bytes", None)
    except Exception:
        cap = None
    if not cap:
        cap = 64 * 1024 * 1024  # conservative default (v7x per-core VMEM)
    return int(min(int(cap) // 2, 64 * 1024 * 1024))


def _pick_tiles(bp, l, cp, elems_cap):
    """Pick (tb, tc): lane tile is a multiple of 128 dividing cp; block <= elems_cap."""
    n_lane = cp // 128
    lane_divs = [d for d in range(1, n_lane + 1) if n_lane % d == 0]
    t = 1
    for d in lane_divs:
        if l * 128 * d <= elems_cap:
            t = d
    tc = 128 * t

    batch_divs = [d for d in range(1, bp + 1) if bp % d == 0]
    tb = 1
    for d in batch_divs:
        if d * l * tc <= elems_cap:
            tb = d

    # Keep >=2 grid steps when the tensor allows it, so both v7x TensorCores get work and
    # the input/output pipeline has something to overlap.
    if tb == bp and tc == cp and bp * n_lane >= 2:
        if bp >= 2:
            tb = [d for d in batch_divs if d < bp][-1]
        else:
            tc = 128 * [d for d in lane_divs if d < n_lane][-1]
    return tb, tc


def _call_decomp(arr, kernel_size):
    """arr: [Bp, L, Cp] with Cp % 128 == 0; moving average runs along axis 1 per (Bp, Cp)."""
    bp, l, cp = arr.shape
    assert cp % 128 == 0
    pad = kernel_size // 2
    lp = l + 2 * pad

    vmem_limit = _vmem_limit_bytes()
    itemsize = jnp.dtype(arr.dtype).itemsize
    # Residency per output element: double-buffered input + 2 double-buffered outputs +
    # f32 padded scratch + in-kernel f32 value temporaries (xf / acc / term).
    per_elem = 2 * itemsize + 4 * itemsize + 4 + 16
    elems_cap = max(1, min(1 << 20, vmem_limit // per_elem))  # ~4 MiB f32 (v5e/v6e), ~3 MiB (v7x)

    tb, tc = _pick_tiles(bp, l, cp, elems_cap)
    grid = (bp // tb, cp // tc)

    spec = pl.BlockSpec((tb, l, tc), lambda b, c: (b, 0, c))
    kernel = functools.partial(_decomp_kernel, kernel_size=kernel_size, pad=pad)

    total = bp * l * cp
    cost = pl.CostEstimate(
        flops=int((kernel_size + 2) * total),
        transcendentals=0,
        bytes_accessed=int(3 * total * itemsize),
    )

    return pl.pallas_call(
        kernel,
        out_shape=(
            jax.ShapeDtypeStruct((bp, l, cp), arr.dtype),  # seasonal
            jax.ShapeDtypeStruct((bp, l, cp), arr.dtype),  # trend
        ),
        grid=grid,
        in_specs=[spec],
        out_specs=(spec, spec),
        scratch_shapes=[pltpu.VMEM((tb, lp, tc), jnp.float32)],
        compiler_params=pltpu.CompilerParams(
            dimension_semantics=("parallel", "parallel"),
            vmem_limit_bytes=vmem_limit,
        ),
        cost_estimate=cost,
    )(arr)


def _round_up(n, m):
    return ((n + m - 1) // m) * m


@functools.partial(jax.jit, static_argnames=("kernel_size",))
def series_decomposition(x, kernel_size):
    """x: [B, L, C] float array. Returns (seasonal, trend), each [B, L, C]."""
    assert kernel_size % 2 == 1, "kernel_size must be odd so that L_out == L"
    b, l, c = x.shape

    if c % 128 == 0:
        # Already lane-dense in the native layout: no transposes, no padding.
        return _call_decomp(x, kernel_size)

    if c >= 128:
        # Pad channels up to the next 128 multiple (<2x traffic, no transposes) so stores and
        # output DMAs stay lane-dense; slice the padding off afterwards.
        cpad = _round_up(c, 128)
        arr = jnp.pad(x, ((0, 0), (0, 0), (0, cpad - c)))
        seasonal, trend = _call_decomp(arr, kernel_size)
        return seasonal[:, :, :c], trend[:, :, :c]

    # Small channel count: fold batch into the lane dimension and pad it to a 128 multiple so
    # the kernel's stores and DMAs are lane-dense.  (See module-level TODO about keeping the
    # folded layout across neighbouring ops to drop the wrapper transposes.)
    folded = b * c
    fpad = _round_up(folded, 128)
    arr = jnp.transpose(x, (1, 0, 2)).reshape(1, l, folded)
    if fpad != folded:
        arr = jnp.pad(arr, ((0, 0), (0, 0), (0, fpad - folded)))
    seasonal, trend = _call_decomp(arr, kernel_size)
    seasonal = seasonal[0, :, :folded].reshape(l, b, c).transpose(1, 0, 2)
    trend = trend[0, :, :folded].reshape(l, b, c).transpose(1, 0, 2)
    return seasonal, trend


def _reference_numpy(x, kernel_size):
    """Pure-numpy reference matching torch.nn.AvgPool1d(k, stride=1, padding=k//2)."""
    B, L, C = x.shape
    pad = kernel_size // 2
    xp = np.pad(np.asarray(x, dtype=np.float64), ((0, 0), (pad, pad), (0, 0)))
    trend = np.zeros((B, L, C), dtype=np.float64)
    for j in range(kernel_size):
        trend += xp[:, j:j + L, :]
    trend /= kernel_size
    seasonal = np.asarray(x, dtype=np.float64) - trend
    return seasonal, trend


def _check(x, kernel_size):
    seasonal, trend = series_decomposition(x, kernel_size)
    seasonal = jax.block_until_ready(seasonal)
    trend = jax.block_until_ready(trend)
    ref_seasonal, ref_trend = _reference_numpy(np.asarray(x), kernel_size)
    np.testing.assert_allclose(np.asarray(trend), ref_trend, rtol=1e-5, atol=1e-5)
    np.testing.assert_allclose(np.asarray(seasonal), ref_seasonal, rtol=1e-5, atol=1e-5)


if __name__ == "__main__":
    key = jax.random.PRNGKey(0)
    k0, k1, k2, k3, k4 = jax.random.split(key, 5)

    # 1) Small channels (C < 128), small k: fold path + tap sum.
    _check(jax.random.normal(k0, (2, 16, 8), dtype=jnp.float32), 5)

    # 2) Lane-dense native path (C % 128 == 0), small k.
    _check(jax.random.normal(k1, (2, 16, 128), dtype=jnp.float32), 3)

    # 3) Small channels, Autoformer-typical k=25: fold path + log-depth doubling.
    _check(jax.random.normal(k2, (2, 32, 8), dtype=jnp.float32), 25)

    # 4) Lane-dense native path, k=25: doubling path with native layout.
    _check(jax.random.normal(k3, (2, 32, 128), dtype=jnp.float32), 25)

    # 5) C >= 128 but not a multiple of 128: channel-padded native path.
    _check(jax.random.normal(k4, (2, 16, 160), dtype=jnp.float32), 7)

    print("KERNEL_OK")
</pallas_src>

<mosaic_0001>
module attributes {stable_mosaic.version = 11 : i64} {
  func.func @_decomp_kernel(%arg0: i32, %arg1: i32, %arg2: memref<1x16x128xf32, #tpu.memory_space<vmem>>, %arg3: memref<1x16x128xf32, #tpu.memory_space<vmem>>, %arg4: memref<1x16x128xf32, #tpu.memory_space<vmem>>, %arg5: memref<1x20x128xf32, #tpu.memory_space<vmem>>) attributes {dimension_semantics = [#tpu.dimension_semantics<parallel>, #tpu.dimension_semantics<parallel>], iteration_bounds = array<i64: 1, 1>, scalar_prefetch = 0 : i64, scratch_operands = 1 : i64, tpu.core_type = #tpu.core_type<tc>, window_params = [{transform_indices = @transform_0, window_bounds = array<i64: 1, 16, 128>}, {transform_indices = @transform_1, window_bounds = array<i64: 1, 16, 128>}, {transform_indices = @transform_2, window_bounds = array<i64: 1, 16, 128>}]} {
    %c0 = arith.constant 0 : index
    %c0_0 = arith.constant 0 : index
    %c0_1 = arith.constant 0 : index
    %0 = vector.load %arg2[%c0, %c0_0, %c0_1] : memref<1x16x128xf32, #tpu.memory_space<vmem>>, vector<1x16x128xf32>
    %cst = arith.constant 0.000000e+00 : f32
    %1 = vector.broadcast %cst : f32 to vector<1x2x128xf32>
    %c0_2 = arith.constant 0 : index
    %c0_3 = arith.constant 0 : index
    %c0_4 = arith.constant 0 : index
    %2 = vector.load %arg5[%c0_2, %c0_3, %c0_4] : memref<1x20x128xf32, #tpu.memory_space<vmem>>, vector<1x2x128xf32>
    tpu.vector_store %arg5[%c0_2, %c0_3, %c0_4], %1 {strides = array<i32>} : memref<1x20x128xf32, #tpu.memory_space<vmem>>, vector<1x2x128xf32>,
    %c0_5 = arith.constant 0 : index
    %c18 = arith.constant 18 : index
    %c0_6 = arith.constant 0 : index
    %3 = vector.load %arg5[%c0_5, %c18, %c0_6] : memref<1x20x128xf32, #tpu.memory_space<vmem>>, vector<1x2x128xf32>
    tpu.vector_store %arg5[%c0_5, %c18, %c0_6], %1 {strides = array<i32>} : memref<1x20x128xf32, #tpu.memory_space<vmem>>, vector<1x2x128xf32>,
    %c0_7 = arith.constant 0 : index
    %c2 = arith.constant 2 : index
    %c0_8 = arith.constant 0 : index
    %4 = vector.load %arg5[%c0_7, %c2, %c0_8] : memref<1x20x128xf32, #tpu.memory_space<vmem>>, vector<1x16x128xf32>
    tpu.vector_store %arg5[%c0_7, %c2, %c0_8], %0 {strides = array<i32>} : memref<1x20x128xf32, #tpu.memory_space<vmem>>, vector<1x16x128xf32>,
    %c0_9 = arith.constant 0 : index
    %c0_10 = arith.constant 0 : index
    %c0_11 = arith.constant 0 : index
    %5 = vector.load %arg5[%c0_9, %c0_10, %c0_11] : memref<1x20x128xf32, #tpu.memory_space<vmem>>, vector<1x16x128xf32>
    %c0_12 = arith.constant 0 : index
    %c1 = arith.constant 1 : index
    %c0_13 = arith.constant 0 : index
    %6 = vector.load %arg5[%c0_12, %c1, %c0_13] : memref<1x20x128xf32, #tpu.memory_space<vmem>>, vector<1x16x128xf32>
    %7 = arith.addf %5, %6 : vector<1x16x128xf32>
    %c0_14 = arith.constant 0 : index
    %c2_15 = arith.constant 2 : index
    %c0_16 = arith.constant 0 : index
    %8 = vector.load %arg5[%c0_14, %c2_15, %c0_16] : memref<1x20x128xf32, #tpu.memory_space<vmem>>, vector<1x16x128xf32>
    %9 = arith.addf %7, %8 : vector<1x16x128xf32>
    %c0_17 = arith.constant 0 : index
    %c3 = arith.constant 3 : index
    %c0_18 = arith.constant 0 : index
    %10 = vector.load %arg5[%c0_17, %c3, %c0_18] : memref<1x20x128xf32, #tpu.memory_space<vmem>>, vector<1x16x128xf32>
    %11 = arith.addf %9, %10 : vector<1x16x128xf32>
    %c0_19 = arith.constant 0 : index
    %c4 = arith.constant 4 : index
    %c0_20 = arith.constant 0 : index
    %12 = vector.load %arg5[%c0_19, %c4, %c0_20] : memref<1x20x128xf32, #tpu.memory_space<vmem>>, vector<1x16x128xf32>
    %13 = arith.addf %11, %12 : vector<1x16x128xf32>
    %cst_21 = arith.constant 2.000000e-01 : f32
    %14 = vector.broadcast %cst_21 : f32 to vector<1x16x128xf32>
    %15 = arith.mulf %13, %14 : vector<1x16x128xf32>
    %c0_22 = arith.constant 0 : index
    %c0_23 = arith.constant 0 : index
    %c0_24 = arith.constant 0 : index
    %16 = vector.load %arg4[%c0_22, %c0_23, %c0_24] : memref<1x16x128xf32, #tpu.memory_space<vmem>>, vector<1x16x128xf32>
    tpu.vector_store %arg4[%c0_22, %c0_23, %c0_24], %15 {strides = array<i32>} : memref<1x16x128xf32, #tpu.memory_space<vmem>>, vector<1x16x128xf32>,
    %17 = arith.subf %0, %15 : vector<1x16x128xf32>
    %c0_25 = arith.constant 0 : index
    %c0_26 = arith.constant 0 : index
    %c0_27 = arith.constant 0 : index
    %18 = vector.load %arg3[%c0_25, %c0_26, %c0_27] : memref<1x16x128xf32, #tpu.memory_space<vmem>>, vector<1x16x128xf32>
    tpu.vector_store %arg3[%c0_25, %c0_26, %c0_27], %17 {strides = array<i32>} : memref<1x16x128xf32, #tpu.memory_space<vmem>>, vector<1x16x128xf32>,
    return
  }
  func.func @transform_0(%arg0: i32, %arg1: i32) -> (i32, i32, i32) {
    %c0_i32 = arith.constant 0 : i32
    %c0_i32_0 = arith.constant 0 : i32
    return %arg0, %c0_i32, %arg1 : i32, i32, i32
  }
  func.func @transform_1(%arg0: i32, %arg1: i32) -> (i32, i32, i32) {
    %c0_i32 = arith.constant 0 : i32
    %c0_i32_0 = arith.constant 0 : i32
    return %arg0, %c0_i32, %arg1 : i32, i32, i32
  }
  func.func @transform_2(%arg0: i32, %arg1: i32) -> (i32, i32, i32) {
    %c0_i32 = arith.constant 0 : i32
    %c0_i32_0 = arith.constant 0 : i32
    return %arg0, %c0_i32, %arg1 : i32, i32, i32
  }
}

</mosaic_0001>

<llo_original>
// kernel: series_decomposition.1
$region0: #{series_decomposition.1}
  #allocation0 [shape = 'u32[]', space=smem, size = 0x4, offset = 0x4, fixed_abs, tag = 'smem constant byte address 0x4 - core index']
  #allocation1 [shape = 'u32[144,128]{1,0:T(1,128)}', space=vmem, size = 0x12000, scoped, tag = 'internal scratch']
  #allocation2 [shape = 'f32[1,20,128]{2,1,0:T(8,128)}', space=vmem, size = 0x3000, scoped, tag = 'scratch operand']
  %s0 = inlined_call_operand.vmem [shape: f32[1,16,128], index: 0, kind: input, shape index: {}]
  %s1 = inlined_call_operand.vmem [shape: f32[1,16,128], index: 1, kind: output, shape index: {0}]
  %s2 = inlined_call_operand.vmem [shape: f32[1,16,128], index: 2, kind: output, shape index: {1}]
  %3 = xla_tuple %s1, %s2
  %s4 = sld [smem:[#allocation0]]
  $region22: #{series_decomposition.1} parent=0
    _
  %s6 = ssub.s32 1, %s4
  %s7 = scalar_select 0, %s6, %s4
  // Predicated region
  $region2: #{series_decomposition.1} parent=0 // pred_check
    _
  $region3: #{series_decomposition.1} parent=0 // pred_check_branch
    %9 = sbr.rel (0) target = $region5
  $region4: #{series_decomposition.1} parent=0 // pred_region
    _
  $region5: #{series_decomposition.1} parent=0 // pred_fallthru
    _
  %v10 = vld [vmem:[%s0] sm:$0xff]
  %v11 = vld [vmem:[%s0 + $0x8] sm:$0xff]
  %12 = vst [vmem:[#allocation2] sm:$0x3] 0.0
  %13 = vst [vmem:[#allocation2 + $0x12] sm:$0x3] 0.0
  %14 = vst [vmem:[#allocation2 + $0x2] sm:$0xff] %v10
  %15 = vst [vmem:[#allocation2 + $0xa] sm:$0xff] %v11
  %v16 = vld [vmem:[#allocation2] sm:$0xff]
  %v17 = vld [vmem:[#allocation2 + $0x8] sm:$0xff]
  %v18 = vld [vmem:[#allocation2 + $0x1] sm:$0xff]
  %v19 = vld [vmem:[#allocation2 + $0x9] sm:$0xff]
  %v20 = vadd.f32 %v16, %v18
  %v21 = vadd.f32 %v17, %v19
  %v22 = vld [vmem:[#allocation2 + $0x2] sm:$0xff]
  %v23 = vld [vmem:[#allocation2 + $0xa] sm:$0xff]
  %v24 = vadd.f32 %v20, %v22
  %v25 = vadd.f32 %v21, %v23
  %v26 = vld [vmem:[#allocation2 + $0x3] sm:$0xff]
  %v27 = vld [vmem:[#allocation2 + $0xb] sm:$0xff]
  %v28 = vadd.f32 %v24, %v26
  %v29 = vadd.f32 %v25, %v27
  %v30 = vld [vmem:[#allocation2 + $0x4] sm:$0xff]
  %v31 = vld [vmem:[#allocation2 + $0xc] sm:$0xff]
  %v32 = vadd.f32 %v28, %v30
  %v33 = vadd.f32 %v29, %v31
  %v34 = vmul.f32 %v32, 0.2
  %v35 = vmul.f32 %v33, 0.2
  %36 = vst [vmem:[%s2] sm:$0xff] %v34
  %37 = vst [vmem:[%s2 + $0x8] sm:$0xff] %v35
  %v38 = vsub.f32 %v10, %v34
  %v39 = vsub.f32 %v11, %v35
  %40 = vst [vmem:[%s1] sm:$0xff] %v38
  %41 = vst [vmem:[%s1 + $0x8] sm:$0xff] %v39
  // Predicated region
  $region6: #{series_decomposition.1} parent=0 // pred_check
    _
  $region7: #{series_decomposition.1} parent=0 // pred_check_branch
    %43 = sbr.rel (0) target = $region9
  $region8: #{series_decomposition.1} parent=0 // pred_region
    _
  $region9: #{series_decomposition.1} parent=0 // pred_fallthru
    _
  // Predicated region
  $region10: #{series_decomposition.1} parent=0 // pred_check
    _
  $region11: #{series_decomposition.1} parent=0 // pred_check_branch
    %45 = sbr.rel (0) target = $region13
  $region12: #{series_decomposition.1} parent=0 // pred_region
    _
  $region13: #{series_decomposition.1} parent=0 // pred_fallthru
    _
  // Predicated region
  $region14: #{series_decomposition.1} parent=0 // pred_check
    _
  $region15: #{series_decomposition.1} parent=0 // pred_check_branch
    %47 = sbr.rel (0) target = $region17
  $region16: #{series_decomposition.1} parent=0 // pred_region
    _
  $region17: #{series_decomposition.1} parent=0 // pred_fallthru
    _
  // Predicated region
  $region18: #{series_decomposition.1} parent=0 // pred_check
    _
  $region19: #{series_decomposition.1} parent=0 // pred_check_branch
    %49 = sbr.rel (0) target = $region21
  $region20: #{series_decomposition.1} parent=0 // pred_region
    _
  $region21: #{series_decomposition.1} parent=0 // pred_fallthru
    _

</llo_original>
